<compile_context>
chip_gen: v7x
topology: tpu7x:2x2x1
jax: 0.10.0
libtpu: 0.0.40
codegen_flags: <defaults>
</compile_context>

<pallas_src>
import functools

import jax
import jax.numpy as jnp
from jax.experimental import pallas as pl
from jax.experimental.pallas import tpu as pltpu


def _round_up(x, m):
    return ((x + m - 1) // m) * m


def _proxy_nca_tile_kernel(x_ref, pt_ref, scale_ref, bias_ref, xsq1_ref, y_ref,
                           out_ref, *, num_rows, block_b, mask_classes,
                           mask_rows, approx_recip):
    # MXU: (TB, Dp) x (Dp, Cp); operands bf16 (fast_math) or f32, f32 accum.
    xp = jnp.dot(x_ref[...], pt_ref[...],
                 preferred_element_type=jnp.float32)           # (TB, Cp)

    # Squared distance to unit-norm proxies: (||x||^2 + 1) + (-2/||p||) * x.p
    sq_dist = jnp.maximum(xsq1_ref[...] + xp * scale_ref[...], 0.0)
    logits = -jnp.sqrt(sq_dist)                                # == -cdist(x, P)
    if mask_classes:
        # Precomputed (1, Cp) bias row: 0 for real classes, -1e30 for padding.
        logits = logits + bias_ref[...]

    # Softmax over classes -- only the label column's probability is needed,
    # so never materialize the full probability matrix or a float one-hot.
    m = jnp.max(logits, axis=1, keepdims=True)
    e = jnp.exp(logits - m)                                    # (TB, Cp)
    denom = jnp.sum(e, axis=1, keepdims=True)                  # (TB, 1)
    cls = jax.lax.broadcasted_iota(jnp.int32, e.shape, 1)
    e_lbl = jnp.sum(jnp.where(y_ref[...] == cls, e, 0.0), axis=1, keepdims=True)
    exp_p = e_lbl * pl.reciprocal(denom, approx=approx_recip)  # P(true class)

    # -log(p) / (1 - p), with (1 - p) clamped away from the pole p -> 1.
    one_minus = jnp.maximum(1.0 - exp_p, 1e-30)
    term = -jnp.log(exp_p) * pl.reciprocal(one_minus, approx=approx_recip)
    if mask_rows:                                              # padded batch rows
        row = (pl.program_id(0) * block_b
               + jax.lax.broadcasted_iota(jnp.int32, term.shape, 0))
        term = jnp.where(row < num_rows, term, 0.0)

    # Per-tile partial sum, broadcast over a full (8, 128) vreg so the output
    # store is a lane-dense unmasked vst.
    out_ref[...] = jnp.broadcast_to(jnp.sum(term), out_ref.shape)


@functools.partial(jax.jit,
                   static_argnames=("block_b", "fast_math",
                                    "single_buffer_resident"))
def _proxy_nca_loss_impl(x, proxies, y, *, block_b=None, fast_math=True,
                         single_buffer_resident=True):
    B, D = x.shape
    C, D2 = proxies.shape
    assert D == D2, (x.shape, proxies.shape)

    f32 = jnp.float32
    x_dtype = jnp.bfloat16 if fast_math else f32
    p_dtype = jnp.bfloat16 if fast_math else f32
    x_bytes = 2 if fast_math else 4
    p_bytes = 2 if fast_math else 4

    # MXU / lane friendly padded dims.  C pads to 128 (full MXU width on v5e,
    # less wasted VPU work than 256 on v6e/v7x); D (the K / lane axis) to 128.
    d_pad = _round_up(D, 128)
    c_pad = _round_up(C, 128)

    # Row granularity of the batch tile (bf16 packs 16 rows per sublane tile).
    g = 16 if x_dtype == jnp.bfloat16 else 8

    # Scoped-VMEM budget from the actual chip (v5e/v6e: 128 MiB physical,
    # v7x: 64 MiB), with headroom for Mosaic internal scratch / semaphores.
    try:
        vmem_cap = int(pltpu.get_tpu_info().vmem_capacity_bytes)
    except Exception:
        vmem_cap = 64 * 2**20                      # conservative (v7x-sized)
    vmem_limit = int(min(56 * 2**20, max(32 * 2**20, (3 * vmem_cap) // 4)))

    n_res_bufs = 1 if single_buffer_resident else 2
    resident_bytes = n_res_bufs * (d_pad * c_pad * p_bytes + 2 * c_pad * 4)
    # Per-batch-row bytes: double-buffered x tile + live (TB, Cp) f32/i32
    # temporaries (logits, exp, iota, select slack) + tiny per-row columns.
    per_row_bytes = 2 * d_pad * x_bytes + 6 * c_pad * 4 + 4 * 4 * 4
    headroom = 6 * 2**20

    if block_b is None:
        budget = max(2 * 2**20, vmem_limit - resident_bytes - headroom)
        block_b = max(g, min(2048, budget // per_row_bytes))
        block_b = max(g, (min(int(block_b), _round_up(B, g)) // g) * g)
        # Keep at least 2 grid tiles when the batch allows it, so the
        # "parallel" batch axis can span both v7x TensorCores (one extra
        # ~0.35us grid step on single-TC chips -- negligible).
        if block_b >= _round_up(B, g) and B > g:
            block_b = _round_up(-(-B // 2), g)
    block_b = max(g, (int(block_b) // g) * g)
    b_pad = _round_up(B, block_b)
    num_tiles = b_pad // block_b
    # TODO(synk): add a class-axis ("arbitrary", innermost) online-softmax grid
    # once resident proxies + (TB, Cp) temporaries approach vmem_limit.

    x32 = x.astype(f32)
    p32 = proxies.astype(f32)

    # Column scale: -2 / ||p|| (proxy normalization and the -2 folded together).
    inv_norm = jax.lax.rsqrt(jnp.maximum(jnp.sum(p32 * p32, axis=-1), 1e-24))
    scale = jnp.zeros((1, c_pad), f32).at[0, :C].set(-2.0 * inv_norm)
    # Padded-class bias row: 0 for real classes, -1e30 for padded ones.
    bias = jnp.zeros((1, c_pad), f32).at[0, C:].set(-1e30)

    p_t = jnp.zeros((d_pad, c_pad), p_dtype).at[:D, :C].set(p32.T.astype(p_dtype))

    # x in the MXU dtype; ||x||^2 + 1 precomputed in f32 from the *same*
    # (possibly bf16-rounded) x the MXU sees, so the expanded distance stays
    # internally consistent near zero distance.
    x_mxu = x32.astype(x_dtype)
    xsq1 = jnp.sum(x_mxu.astype(f32) ** 2, axis=-1, keepdims=True) + 1.0
    x_pad = jnp.zeros((b_pad, d_pad), x_dtype).at[:B, :D].set(x_mxu)
    xsq1_pad = jnp.ones((b_pad, 1), f32).at[:B].set(xsq1)
    y_pad = jnp.zeros((b_pad, 1), jnp.int32).at[:B, 0].set(y.astype(jnp.int32))

    kernel = functools.partial(
        _proxy_nca_tile_kernel,
        num_rows=B, block_b=block_b,
        mask_classes=(c_pad != C), mask_rows=(b_pad != B),
        approx_recip=fast_math)

    resident_mode = pl.Buffered(1) if single_buffer_resident else None

    partials = pl.pallas_call(
        kernel,
        out_shape=jax.ShapeDtypeStruct((num_tiles * 8, 128), f32),
        grid_spec=pltpu.PrefetchScalarGridSpec(
            num_scalar_prefetch=0,
            grid=(num_tiles,),
            in_specs=[
                pl.BlockSpec((block_b, d_pad), lambda i: (i, 0)),      # x tile
                pl.BlockSpec((d_pad, c_pad), lambda i: (0, 0),
                             pipeline_mode=resident_mode),             # proxies^T
                pl.BlockSpec((1, c_pad), lambda i: (0, 0),
                             pipeline_mode=resident_mode),             # -2/||p||
                pl.BlockSpec((1, c_pad), lambda i: (0, 0),
                             pipeline_mode=resident_mode),             # class bias
                pl.BlockSpec((block_b, 1), lambda i: (i, 0)),          # ||x||^2+1
                pl.BlockSpec((block_b, 1), lambda i: (i, 0)),          # labels
            ],
            out_specs=pl.BlockSpec((8, 128), lambda i: (i, 0)),
        ),
        compiler_params=pltpu.CompilerParams(
            dimension_semantics=("parallel",),
            vmem_limit_bytes=vmem_limit),
    )(x_pad, p_t, scale, bias, xsq1_pad, y_pad)

    # Each tile wrote its partial sum broadcast over one (8, 128) block.
    per_tile = partials.reshape(num_tiles, 8, 128)[:, 0, 0]
    return jnp.sum(per_tile) / B


def proxy_nca_loss(x, proxies, y, *, block_b=None, fast_math=True):
    """x: (B, D) float, proxies: (C, D) float, y: (B,) int labels -> scalar f32."""
    try:
        return _proxy_nca_loss_impl(x, proxies, y, block_b=block_b,
                                    fast_math=fast_math,
                                    single_buffer_resident=True)
    except Exception:
        # pl.Buffered(1) on the resident proxy block is a VMEM optimization
        # only; fall back to default double-buffering if this Pallas build
        # rejects single-buffered pipeline_mode.
        return _proxy_nca_loss_impl(x, proxies, y, block_b=block_b,
                                    fast_math=fast_math,
                                    single_buffer_resident=False)


def init_proxies(key, num_classes, dim):
    # torch.nn.init.xavier_uniform_ on a (num_classes, dim) parameter:
    # bound = sqrt(6 / (fan_in + fan_out)), fan_in=dim, fan_out=num_classes.
    bound = (6.0 / (num_classes + dim)) ** 0.5
    return jax.random.uniform(
        key, (num_classes, dim), dtype=jnp.float32, minval=-bound, maxval=bound)


def _reference_loss(x, proxies, y):
    # Pure-JAX reference with the exact PyTorch semantics (cdist -> softmax).
    pn = proxies / jnp.linalg.norm(proxies, axis=-1, keepdims=True)
    dist = jnp.linalg.norm(x[:, None, :] - pn[None, :, :], axis=-1)
    prob = jax.nn.softmax(-dist, axis=1)
    c = proxies.shape[0]
    exp_p = jnp.sum(prob * (y[:, None] == jnp.arange(c)[None, :]), axis=1)
    return jnp.mean(-jnp.log(exp_p) / (1.0 - exp_p))


if __name__ == "__main__":
    B, C, D = 8, 16, 32
    key = jax.random.PRNGKey(0)
    k_prox, k_x, k_y = jax.random.split(key, 3)

    proxies = init_proxies(k_prox, C, D)
    x = jax.random.normal(k_x, (B, D), dtype=jnp.float32)
    y = jax.random.randint(k_y, (B,), 0, C, dtype=jnp.int32)

    ref = _reference_loss(x, proxies, y)

    # Precise path: f32 MXU operands, exact reciprocals.
    loss_exact = proxy_nca_loss(x, proxies, y, fast_math=False)
    jax.block_until_ready(loss_exact)
    assert jnp.allclose(loss_exact, ref, rtol=1e-4, atol=1e-4), (loss_exact, ref)

    # Fast path: bf16 MXU operands + approximate EUP reciprocals.
    loss_fast = proxy_nca_loss(x, proxies, y, fast_math=True)
    jax.block_until_ready(loss_fast)
    assert jnp.allclose(loss_fast, ref, rtol=5e-2, atol=5e-2), (loss_fast, ref)

    print("KERNEL_OK")
</pallas_src>

<mosaic_0001>
module attributes {stable_mosaic.version = 11 : i64} {
  func.func @_proxy_nca_tile_kernel(%arg0: i32, %arg1: memref<8x128xf32, #tpu.memory_space<vmem>>, %arg2: memref<128x128xf32, #tpu.memory_space<vmem>>, %arg3: memref<1x128xf32, #tpu.memory_space<vmem>>, %arg4: memref<1x128xf32, #tpu.memory_space<vmem>>, %arg5: memref<8x1xf32, #tpu.memory_space<vmem>>, %arg6: memref<8x1xi32, #tpu.memory_space<vmem>>, %arg7: memref<8x128xf32, #tpu.memory_space<vmem>>) attributes {dimension_semantics = [#tpu.dimension_semantics<parallel>], iteration_bounds = array<i64: 1>, scalar_prefetch = 0 : i64, scratch_operands = 0 : i64, tpu.core_type = #tpu.core_type<tc>, window_params = [{transform_indices = @transform_0, window_bounds = array<i64: 8, 128>}, {pipeline_mode = #tpu.pipeline_mode<synchronous>, transform_indices = @transform_1, window_bounds = array<i64: 128, 128>}, {pipeline_mode = #tpu.pipeline_mode<synchronous>, transform_indices = @transform_2, window_bounds = array<i64: 1, 128>}, {pipeline_mode = #tpu.pipeline_mode<synchronous>, transform_indices = @transform_3, window_bounds = array<i64: 1, 128>}, {transform_indices = @transform_4, window_bounds = array<i64: 8, 1>}, {transform_indices = @transform_5, window_bounds = array<i64: 8, 1>}, {transform_indices = @transform_6, window_bounds = array<i64: 8, 128>}]} {
    %c0 = arith.constant 0 : index
    %c0_0 = arith.constant 0 : index
    %0 = vector.load %arg1[%c0, %c0_0] : memref<8x128xf32, #tpu.memory_space<vmem>>, vector<8x128xf32>
    %c0_1 = arith.constant 0 : index
    %c0_2 = arith.constant 0 : index
    %1 = vector.load %arg2[%c0_1, %c0_2] : memref<128x128xf32, #tpu.memory_space<vmem>>, vector<128x128xf32>
    %cst = arith.constant dense<0.000000e+00> : vector<8x128xf32>
    %2 = tpu.matmul %0, %1, %cst {dimension_numbers = #tpu.dot_dimension_numbers<[1], [0], [0], [1], [0, 0, 1, 1], [], []>} : vector<8x128xf32>, vector<128x128xf32>, vector<8x128xf32> -> vector<8x128xf32>
    %c0_3 = arith.constant 0 : index
    %c0_4 = arith.constant 0 : index
    %3 = vector.load %arg5[%c0_3, %c0_4] : memref<8x1xf32, #tpu.memory_space<vmem>>, vector<8x1xf32>
    %c0_5 = arith.constant 0 : index
    %c0_6 = arith.constant 0 : index
    %4 = vector.load %arg3[%c0_5, %c0_6] : memref<1x128xf32, #tpu.memory_space<vmem>>, vector<1x128xf32>
    %5 = vector.broadcast %4 : vector<1x128xf32> to vector<8x128xf32>
    %6 = arith.mulf %2, %5 : vector<8x128xf32>
    %7 = vector.broadcast %3 : vector<8x1xf32> to vector<8x128xf32>
    %8 = arith.addf %7, %6 : vector<8x128xf32>
    %cst_7 = arith.constant 0.000000e+00 : f32
    %9 = vector.broadcast %cst_7 : f32 to vector<8x128xf32>
    %10 = arith.maximumf %8, %9 : vector<8x128xf32>
    %11 = math.sqrt %10 : vector<8x128xf32>
    %cst_8 = arith.constant 0.000000e+00 : f32
    %12 = vector.broadcast %cst_8 : f32 to vector<8x128xf32>
    %13 = arith.subf %12, %11 : vector<8x128xf32>
    %c0_9 = arith.constant 0 : index
    %c0_10 = arith.constant 0 : index
    %14 = vector.load %arg4[%c0_9, %c0_10] : memref<1x128xf32, #tpu.memory_space<vmem>>, vector<1x128xf32>
    %15 = vector.broadcast %14 : vector<1x128xf32> to vector<8x128xf32>
    %16 = arith.addf %13, %15 : vector<8x128xf32>
    %cst_11 = arith.constant dense<0xFF800000> : vector<8xf32>
    %17 = vector.multi_reduction <maximumf>, %16, %cst_11 [1] : vector<8x128xf32> to vector<8xf32>
    %18 = vector.shape_cast %17 : vector<8xf32> to vector<8x1xf32>
    %19 = vector.broadcast %18 : vector<8x1xf32> to vector<8x128xf32>
    %20 = arith.subf %16, %19 : vector<8x128xf32>
    %21 = math.exp %20 : vector<8x128xf32>
    %cst_12 = arith.constant dense<0.000000e+00> : vector<8xf32>
    %22 = vector.multi_reduction <add>, %21, %cst_12 [1] : vector<8x128xf32> to vector<8xf32>
    %23 = vector.shape_cast %22 : vector<8xf32> to vector<8x1xf32>
    %24 = tpu.iota {dimensions = array<i32: 1>} : vector<8x128xi32>
    %c0_13 = arith.constant 0 : index
    %c0_14 = arith.constant 0 : index
    %25 = vector.load %arg6[%c0_13, %c0_14] : memref<8x1xi32, #tpu.memory_space<vmem>>, vector<8x1xi32>
    %26 = vector.broadcast %25 : vector<8x1xi32> to vector<8x128xi32>
    %27 = arith.cmpi eq, %26, %24 : vector<8x128xi32>
    %cst_15 = arith.constant 0.000000e+00 : f32
    %28 = vector.broadcast %cst_15 : f32 to vector<8x128xf32>
    %29 = arith.select %27, %21, %28 : vector<8x128xi1>, vector<8x128xf32>
    %cst_16 = arith.constant dense<0.000000e+00> : vector<8xf32>
    %30 = vector.multi_reduction <add>, %29, %cst_16 [1] : vector<8x128xf32> to vector<8xf32>
    %31 = vector.shape_cast %30 : vector<8xf32> to vector<8x1xf32>
    %32 = tpu.reciprocal %23 : vector<8x1xf32> -> vector<8x1xf32>
    %33 = arith.mulf %31, %32 : vector<8x1xf32>
    %cst_17 = arith.constant 1.000000e+00 : f32
    %34 = vector.broadcast %cst_17 : f32 to vector<8x1xf32>
    %35 = arith.subf %34, %33 : vector<8x1xf32>
    %cst_18 = arith.constant 1.000000e-30 : f32
    %36 = vector.broadcast %cst_18 : f32 to vector<8x1xf32>
    %37 = arith.maximumf %35, %36 : vector<8x1xf32>
    %38 = math.log %33 : vector<8x1xf32>
    %cst_19 = arith.constant 0.000000e+00 : f32
    %39 = vector.broadcast %cst_19 : f32 to vector<8x1xf32>
    %40 = arith.subf %39, %38 : vector<8x1xf32>
    %41 = tpu.reciprocal %37 : vector<8x1xf32> -> vector<8x1xf32>
    %42 = arith.mulf %40, %41 : vector<8x1xf32>
    %43 = vector.shape_cast %42 : vector<8x1xf32> to vector<1x8x1xf32>
    %cst_20 = arith.constant dense<0.000000e+00> : vector<1xf32>
    %44 = vector.multi_reduction <add>, %43, %cst_20 [1, 2] : vector<1x8x1xf32> to vector<1xf32>
    %45 = vector.shape_cast %44 : vector<1xf32> to vector<1x1x1xf32>
    %46 = vector.extract %45[0, 0, 0] : f32 from vector<1x1x1xf32>
    %47 = vector.broadcast %46 : f32 to vector<8x128xf32>
    %c0_21 = arith.constant 0 : index
    %c0_22 = arith.constant 0 : index
    %48 = vector.load %arg7[%c0_21, %c0_22] : memref<8x128xf32, #tpu.memory_space<vmem>>, vector<8x128xf32>
    tpu.vector_store %arg7[%c0_21, %c0_22], %47 {strides = array<i32>} : memref<8x128xf32, #tpu.memory_space<vmem>>, vector<8x128xf32>,
    return
  }
  func.func @transform_0(%arg0: i32) -> (i32, i32) {
    %c0_i32 = arith.constant 0 : i32
    %c0_i32_0 = arith.constant 0 : i32
    return %arg0, %c0_i32 : i32, i32
  }
  func.func @transform_1(%arg0: i32) -> (i32, i32) {
    %c0_i32 = arith.constant 0 : i32
    %c0_i32_0 = arith.constant 0 : i32
    %c0_i32_1 = arith.constant 0 : i32
    return %c0_i32, %c0_i32_0 : i32, i32
  }
  func.func @transform_2(%arg0: i32) -> (i32, i32) {
    %c0_i32 = arith.constant 0 : i32
    %c0_i32_0 = arith.constant 0 : i32
    %c0_i32_1 = arith.constant 0 : i32
    return %c0_i32, %c0_i32_0 : i32, i32
  }
  func.func @transform_3(%arg0: i32) -> (i32, i32) {
    %c0_i32 = arith.constant 0 : i32
    %c0_i32_0 = arith.constant 0 : i32
    %c0_i32_1 = arith.constant 0 : i32
    return %c0_i32, %c0_i32_0 : i32, i32
  }
  func.func @transform_4(%arg0: i32) -> (i32, i32) {
    %c0_i32 = arith.constant 0 : i32
    %c0_i32_0 = arith.constant 0 : i32
    return %arg0, %c0_i32 : i32, i32
  }
  func.func @transform_5(%arg0: i32) -> (i32, i32) {
    %c0_i32 = arith.constant 0 : i32
    %c0_i32_0 = arith.constant 0 : i32
    return %arg0, %c0_i32 : i32, i32
  }
  func.func @transform_6(%arg0: i32) -> (i32, i32) {
    %c0_i32 = arith.constant 0 : i32
    %c0_i32_0 = arith.constant 0 : i32
    return %arg0, %c0_i32 : i32, i32
  }
}

module attributes {stable_mosaic.version = 11 : i64} {
  func.func @_proxy_nca_tile_kernel(%arg0: i32, %arg1: memref<8x128xf32, #tpu.memory_space<vmem>>, %arg2: memref<128x128xf32, #tpu.memory_space<vmem>>, %arg3: memref<1x128xf32, #tpu.memory_space<vmem>>, %arg4: memref<1x128xf32, #tpu.memory_space<vmem>>, %arg5: memref<8x1xf32, #tpu.memory_space<vmem>>, %arg6: memref<8x1xi32, #tpu.memory_space<vmem>>, %arg7: memref<8x128xf32, #tpu.memory_space<vmem>>) attributes {dimension_semantics = [#tpu.dimension_semantics<parallel>], iteration_bounds = array<i64: 1>, scalar_prefetch = 0 : i64, scratch_operands = 0 : i64, tpu.core_type = #tpu.core_type<tc>, window_params = [{transform_indices = @transform_0, window_bounds = array<i64: 8, 128>}, {pipeline_mode = #tpu.pipeline_mode<synchronous>, transform_indices = @transform_1, window_bounds = array<i64: 128, 128>}, {pipeline_mode = #tpu.pipeline_mode<synchronous>, transform_indices = @transform_2, window_bounds = array<i64: 1, 128>}, {pipeline_mode = #tpu.pipeline_mode<synchronous>, transform_indices = @transform_3, window_bounds = array<i64: 1, 128>}, {transform_indices = @transform_4, window_bounds = array<i64: 8, 1>}, {transform_indices = @transform_5, window_bounds = array<i64: 8, 1>}, {transform_indices = @transform_6, window_bounds = array<i64: 8, 128>}]} {
    %c0 = arith.constant 0 : index
    %c0_0 = arith.constant 0 : index
    %0 = vector.load %arg1[%c0, %c0_0] : memref<8x128xf32, #tpu.memory_space<vmem>>, vector<8x128xf32>
    %c0_1 = arith.constant 0 : index
    %c0_2 = arith.constant 0 : index
    %1 = vector.load %arg2[%c0_1, %c0_2] : memref<128x128xf32, #tpu.memory_space<vmem>>, vector<128x128xf32>
    %cst = arith.constant dense<0.000000e+00> : vector<8x128xf32>
    %2 = tpu.matmul %0, %1, %cst {dimension_numbers = #tpu.dot_dimension_numbers<[1], [0], [0], [1], [0, 0, 1, 1], [], []>} : vector<8x128xf32>, vector<128x128xf32>, vector<8x128xf32> -> vector<8x128xf32>
    %c0_3 = arith.constant 0 : index
    %c0_4 = arith.constant 0 : index
    %3 = vector.load %arg5[%c0_3, %c0_4] : memref<8x1xf32, #tpu.memory_space<vmem>>, vector<8x1xf32>
    %c0_5 = arith.constant 0 : index
    %c0_6 = arith.constant 0 : index
    %4 = vector.load %arg3[%c0_5, %c0_6] : memref<1x128xf32, #tpu.memory_space<vmem>>, vector<1x128xf32>
    %5 = vector.broadcast %4 : vector<1x128xf32> to vector<8x128xf32>
    %6 = arith.mulf %2, %5 : vector<8x128xf32>
    %7 = vector.broadcast %3 : vector<8x1xf32> to vector<8x128xf32>
    %8 = arith.addf %7, %6 : vector<8x128xf32>
    %cst_7 = arith.constant 0.000000e+00 : f32
    %9 = vector.broadcast %cst_7 : f32 to vector<8x128xf32>
    %10 = arith.maximumf %8, %9 : vector<8x128xf32>
    %11 = math.sqrt %10 : vector<8x128xf32>
    %cst_8 = arith.constant 0.000000e+00 : f32
    %12 = vector.broadcast %cst_8 : f32 to vector<8x128xf32>
    %13 = arith.subf %12, %11 : vector<8x128xf32>
    %c0_9 = arith.constant 0 : index
    %c0_10 = arith.constant 0 : index
    %14 = vector.load %arg4[%c0_9, %c0_10] : memref<1x128xf32, #tpu.memory_space<vmem>>, vector<1x128xf32>
    %15 = vector.broadcast %14 : vector<1x128xf32> to vector<8x128xf32>
    %16 = arith.addf %13, %15 : vector<8x128xf32>
    %cst_11 = arith.constant dense<0xFF800000> : vector<8xf32>
    %17 = vector.multi_reduction <maximumf>, %16, %cst_11 [1] : vector<8x128xf32> to vector<8xf32>
    %18 = vector.shape_cast %17 : vector<8xf32> to vector<8x1xf32>
    %19 = vector.broadcast %18 : vector<8x1xf32> to vector<8x128xf32>
    %20 = arith.subf %16, %19 : vector<8x128xf32>
    %21 = math.exp %20 : vector<8x128xf32>
    %cst_12 = arith.constant dense<0.000000e+00> : vector<8xf32>
    %22 = vector.multi_reduction <add>, %21, %cst_12 [1] : vector<8x128xf32> to vector<8xf32>
    %23 = vector.shape_cast %22 : vector<8xf32> to vector<8x1xf32>
    %24 = tpu.iota {dimensions = array<i32: 1>} : vector<8x128xi32>
    %c0_13 = arith.constant 0 : index
    %c0_14 = arith.constant 0 : index
    %25 = vector.load %arg6[%c0_13, %c0_14] : memref<8x1xi32, #tpu.memory_space<vmem>>, vector<8x1xi32>
    %26 = vector.broadcast %25 : vector<8x1xi32> to vector<8x128xi32>
    %27 = arith.cmpi eq, %26, %24 : vector<8x128xi32>
    %cst_15 = arith.constant 0.000000e+00 : f32
    %28 = vector.broadcast %cst_15 : f32 to vector<8x128xf32>
    %29 = arith.select %27, %21, %28 : vector<8x128xi1>, vector<8x128xf32>
    %cst_16 = arith.constant dense<0.000000e+00> : vector<8xf32>
    %30 = vector.multi_reduction <add>, %29, %cst_16 [1] : vector<8x128xf32> to vector<8xf32>
    %31 = vector.shape_cast %30 : vector<8xf32> to vector<8x1xf32>
    %32 = tpu.reciprocal %23 : vector<8x1xf32> -> vector<8x1xf32>
    %33 = arith.mulf %31, %32 : vector<8x1xf32>
    %cst_17 = arith.constant 1.000000e+00 : f32
    %34 = vector.broadcast %cst_17 : f32 to vector<8x1xf32>
    %35 = arith.subf %34, %33 : vector<8x1xf32>
    %cst_18 = arith.constant 1.000000e-30 : f32
    %36 = vector.broadcast %cst_18 : f32 to vector<8x1xf32>
    %37 = arith.maximumf %35, %36 : vector<8x1xf32>
    %38 = math.log %33 : vector<8x1xf32>
    %cst_19 = arith.constant 0.000000e+00 : f32
    %39 = vector.broadcast %cst_19 : f32 to vector<8x1xf32>
    %40 = arith.subf %39, %38 : vector<8x1xf32>
    %41 = tpu.reciprocal %37 : vector<8x1xf32> -> vector<8x1xf32>
    %42 = arith.mulf %40, %41 : vector<8x1xf32>
    %43 = vector.shape_cast %42 : vector<8x1xf32> to vector<1x8x1xf32>
    %cst_20 = arith.constant dense<0.000000e+00> : vector<1xf32>
    %44 = vector.multi_reduction <add>, %43, %cst_20 [1, 2] : vector<1x8x1xf32> to vector<1xf32>
    %45 = vector.shape_cast %44 : vector<1xf32> to vector<1x1x1xf32>
    %46 = vector.extract %45[0, 0, 0] : f32 from vector<1x1x1xf32>
    %47 = vector.broadcast %46 : f32 to vector<8x128xf32>
    %c0_21 = arith.constant 0 : index
    %c0_22 = arith.constant 0 : index
    %48 = vector.load %arg7[%c0_21, %c0_22] : memref<8x128xf32, #tpu.memory_space<vmem>>, vector<8x128xf32>
    tpu.vector_store %arg7[%c0_21, %c0_22], %47 {strides = array<i32>} : memref<8x128xf32, #tpu.memory_space<vmem>>, vector<8x128xf32>,
    return
  }
  func.func @transform_0(%arg0: i32) -> (i32, i32) {
    %c0_i32 = arith.constant 0 : i32
    %c0_i32_0 = arith.constant 0 : i32
    return %arg0, %c0_i32 : i32, i32
  }
  func.func @transform_1(%arg0: i32) -> (i32, i32) {
    %c0_i32 = arith.constant 0 : i32
    %c0_i32_0 = arith.constant 0 : i32
    %c0_i32_1 = arith.constant 0 : i32
    return %c0_i32, %c0_i32_0 : i32, i32
  }
  func.func @transform_2(%arg0: i32) -> (i32, i32) {
    %c0_i32 = arith.constant 0 : i32
    %c0_i32_0 = arith.constant 0 : i32
    %c0_i32_1 = arith.constant 0 : i32
    return %c0_i32, %c0_i32_0 : i32, i32
  }
  func.func @transform_3(%arg0: i32) -> (i32, i32) {
    %c0_i32 = arith.constant 0 : i32
    %c0_i32_0 = arith.constant 0 : i32
    %c0_i32_1 = arith.constant 0 : i32
    return %c0_i32, %c0_i32_0 : i32, i32
  }
  func.func @transform_4(%arg0: i32) -> (i32, i32) {
    %c0_i32 = arith.constant 0 : i32
    %c0_i32_0 = arith.constant 0 : i32
    return %arg0, %c0_i32 : i32, i32
  }
  func.func @transform_5(%arg0: i32) -> (i32, i32) {
    %c0_i32 = arith.constant 0 : i32
    %c0_i32_0 = arith.constant 0 : i32
    return %arg0, %c0_i32 : i32, i32
  }
  func.func @transform_6(%arg0: i32) -> (i32, i32) {
    %c0_i32 = arith.constant 0 : i32
    %c0_i32_0 = arith.constant 0 : i32
    return %arg0, %c0_i32 : i32, i32
  }
}

</mosaic_0001>

<llo_original>
// kernel: _proxy_nca_loss_impl.1
$region0: #{_proxy_nca_loss_impl.1}
  #allocation0 [shape = 'u32[]', space=smem, size = 0x4, offset = 0x4, fixed_abs, tag = 'smem constant byte address 0x4 - core index']
  #allocation1 [shape = 'u32[144,128]{1,0:T(1,128)}', space=vmem, size = 0x12000, scoped, tag = 'internal scratch']
  %s0 = inlined_call_operand.vmem [shape: f32[8,128], index: 0, kind: input, shape index: {}]
  %s1 = inlined_call_operand.vmem [shape: f32[128,128], index: 1, kind: input, shape index: {}]
  %s2 = inlined_call_operand.vmem [shape: f32[1,128], index: 2, kind: input, shape index: {}]
  %s3 = inlined_call_operand.vmem [shape: f32[1,128], index: 3, kind: input, shape index: {}]
  %s4 = inlined_call_operand.vmem [shape: f32[8,1], index: 4, kind: input, shape index: {}]
  %s5 = inlined_call_operand.vmem [shape: s32[8,1], index: 5, kind: input, shape index: {}]
  %s6 = inlined_call_operand.vmem [shape: f32[8,128], index: 6, kind: output, shape index: {}]
  %s7 = sld [smem:[#allocation0]]
  $region34: #{_proxy_nca_loss_impl.1} parent=0
    _
  %s9 = ssub.s32 1, %s7
  %s10 = scalar_select 0, %s9, %s7
  // Predicated region
  $region2: #{_proxy_nca_loss_impl.1} parent=0 // pred_check
    _
  $region3: #{_proxy_nca_loss_impl.1} parent=0 // pred_check_branch
    %12 = sbr.rel (0) target = $region5
  $region4: #{_proxy_nca_loss_impl.1} parent=0 // pred_region
    _
  $region5: #{_proxy_nca_loss_impl.1} parent=0 // pred_fallthru
    _
  // Predicated region
  $region6: #{_proxy_nca_loss_impl.1} parent=0 // pred_check
    _
  $region7: #{_proxy_nca_loss_impl.1} parent=0 // pred_check_branch
    %14 = sbr.rel (0) target = $region9
  $region8: #{_proxy_nca_loss_impl.1} parent=0 // pred_region
    _
  $region9: #{_proxy_nca_loss_impl.1} parent=0 // pred_fallthru
    _
  // Predicated region
  $region10: #{_proxy_nca_loss_impl.1} parent=0 // pred_check
    _
  $region11: #{_proxy_nca_loss_impl.1} parent=0 // pred_check_branch
    %16 = sbr.rel (0) target = $region13
  $region12: #{_proxy_nca_loss_impl.1} parent=0 // pred_region
    _
  $region13: #{_proxy_nca_loss_impl.1} parent=0 // pred_fallthru
    _
  // Predicated region
  $region14: #{_proxy_nca_loss_impl.1} parent=0 // pred_check
    _
  $region15: #{_proxy_nca_loss_impl.1} parent=0 // pred_check_branch
    %18 = sbr.rel (0) target = $region17
  $region16: #{_proxy_nca_loss_impl.1} parent=0 // pred_region
    _
  $region17: #{_proxy_nca_loss_impl.1} parent=0 // pred_fallthru
    _
  // Predicated region
  $region18: #{_proxy_nca_loss_impl.1} parent=0 // pred_check
    _
  $region19: #{_proxy_nca_loss_impl.1} parent=0 // pred_check_branch
    %20 = sbr.rel (0) target = $region21
  $region20: #{_proxy_nca_loss_impl.1} parent=0 // pred_region
    _
  $region21: #{_proxy_nca_loss_impl.1} parent=0 // pred_fallthru
    _
  // Predicated region
  $region22: #{_proxy_nca_loss_impl.1} parent=0 // pred_check
    _
  $region23: #{_proxy_nca_loss_impl.1} parent=0 // pred_check_branch
    %22 = sbr.rel (0) target = $region25
  $region24: #{_proxy_nca_loss_impl.1} parent=0 // pred_region
    _
  $region25: #{_proxy_nca_loss_impl.1} parent=0 // pred_fallthru
    _
  %v23 = vld [vmem:[%s0] sm:$0xff]
  %v24 = vld [vmem:[%s1] sm:$0xff]
  %v25 = vld [vmem:[%s1 + $0x8] sm:$0xff]
  %v26 = vld [vmem:[%s1 + $0x10] sm:$0xff]
  %v27 = vld [vmem:[%s1 + $0x18] sm:$0xff]
  %v28 = vld [vmem:[%s1 + $0x20] sm:$0xff]
  %v29 = vld [vmem:[%s1 + $0x28] sm:$0xff]
  %v30 = vld [vmem:[%s1 + $0x30] sm:$0xff]
  %v31 = vld [vmem:[%s1 + $0x38] sm:$0xff]
  %v32 = vld [vmem:[%s1 + $0x40] sm:$0xff]
  %v33 = vld [vmem:[%s1 + $0x48] sm:$0xff]
  %v34 = vld [vmem:[%s1 + $0x50] sm:$0xff]
  %v35 = vld [vmem:[%s1 + $0x58] sm:$0xff]
  %v36 = vld [vmem:[%s1 + $0x60] sm:$0xff]
  %v37 = vld [vmem:[%s1 + $0x68] sm:$0xff]
  %v38 = vld [vmem:[%s1 + $0x70] sm:$0xff]
  %v39 = vld [vmem:[%s1 + $0x78] sm:$0xff]
  %40 = vmatprep.subr.mxu0 0.0
  %41 = vmatpush1.msra.mxu0 %v24
  %42 = vmatprep.subr.mxu0 0.0
  %43 = vmatpush1.msra.mxu0 %v25
  %44 = vmatprep.subr.mxu0 0.0
  %45 = vmatpush1.msra.mxu0 %v26
  %46 = vmatprep.subr.mxu0 0.0
  %47 = vmatpush1.msra.mxu0 %v27
  %48 = vmatprep.subr.mxu0 0.0
  %49 = vmatpush1.msra.mxu0 %v28
  %50 = vmatprep.subr.mxu0 0.0
  %51 = vmatpush1.msra.mxu0 %v29
  %52 = vmatprep.subr.mxu0 0.0
  %53 = vmatpush1.msra.mxu0 %v30
  %54 = vmatprep.subr.mxu0 0.0
  %55 = vmatpush1.msra.mxu0 %v31
  %56 = vmatprep.subr.mxu0 0.0
  %57 = vmatpush1.msra.mxu0 %v32
  %58 = vmatprep.subr.mxu0 0.0
  %59 = vmatpush1.msra.mxu0 %v33
  %60 = vmatprep.subr.mxu0 0.0
  %61 = vmatpush1.msra.mxu0 %v34
  %62 = vmatprep.subr.mxu0 0.0
  %63 = vmatpush1.msra.mxu0 %v35
  %64 = vmatprep.subr.mxu0 0.0
  %65 = vmatpush1.msra.mxu0 %v36
  %66 = vmatprep.subr.mxu0 0.0
  %67 = vmatpush1.msra.mxu0 %v37
  %68 = vmatprep.subr.mxu0 0.0
  %69 = vmatpush1.msra.mxu0 %v38
  %70 = vmatprep.subr.mxu0 0.0
  %71 = vmatpush1.msra.mxu0 %v39
  %72 = vmatprep.subr.mxu0 0.0
  %73 = vmatpush1.msra.mxu0 0.0
  %74 = vmatprep.subr.mxu0 0.0
  %75 = vmatpush1.msra.mxu0 0.0
  %76 = vmatprep.subr.mxu0 0.0
  %77 = vmatpush1.msra.mxu0 0.0
  %78 = vmatprep.subr.mxu0 0.0
  %79 = vmatpush1.msra.mxu0 0.0
  %80 = vmatprep.subr.mxu0 0.0
  %81 = vmatpush1.msra.mxu0 0.0
  %82 = vmatprep.subr.mxu0 0.0
  %83 = vmatpush1.msra.mxu0 0.0
  %84 = vmatprep.subr.mxu0 0.0
  %85 = vmatpush1.msra.mxu0 0.0
  %86 = vmatprep.subr.mxu0 0.0
  %87 = vmatpush1.msra.mxu0 0.0
  %88 = vmatprep.subr.mxu0 0.0
  %89 = vmatpush1.msra.mxu0 0.0
  %90 = vmatprep.subr.mxu0 0.0
  %91 = vmatpush1.msra.mxu0 0.0
  %92 = vmatprep.subr.mxu0 0.0
  %93 = vmatpush1.msra.mxu0 0.0
  %94 = vmatprep.subr.mxu0 0.0
  %95 = vmatpush1.msra.mxu0 0.0
  %96 = vmatprep.subr.mxu0 0.0
  %97 = vmatpush1.msra.mxu0 0.0
  %98 = vmatprep.subr.mxu0 0.0
  %99 = vmatpush1.msra.mxu0 0.0
  %100 = vmatprep.subr.mxu0 0.0
  %101 = vmatpush1.msra.mxu0 0.0
  %102 = vmatprep.subr.mxu0 0.0
  %103 = vmatpush1.msra.mxu0 0.0
  %104 = vmatprep.mubr.f32.mxu0 0.0
  %105 = vmatmul.mubr.f32.gmra.mrb[0].mxu0 %v23
  %v106 = vpop.f32.mrb[0].mxu0
  %v107 = vadd.f32 0.0, %v106
  %v108 = vpop.f32.mrb[0].mxu0
  %109 = vdwg.mxu0
  %v110 = vld [vmem:[%s4] sm:$0xff]
  %v111 = vld [vmem:[%s2] sm:$0x1]
  %v113 = vlaneseq
  %v114 = vshrl.u32 %v113, 7
  %v115 = vsub.s32 0, %v114
  %v116 = vrot.slane %v111, %v115
  %v118 = vmul.f32 %v107, %v116
  %120 = vset.pattern.permute.xlu0 0
  %121 = vperm.xlu0 %120, %v110
  %v122 = vpop.permute.xlu0 %121
  %v124 = vadd.f32 %v122, %v118
  %v125 = vmax.f32 %v124, 0.0
  %v126 = vrsqrt.pop %v125
  %v127 = vmul.f32 %v125, %v126
  %vm128 = vcmp.eq.f32.partialorder %v125, inf
  %v129 = vsel %vm128, %v125, %v127
  %vm130 = vcmp.eq.f32.partialorder %v125, 0.0
  %v131 = vand.u32 %v125, 2147483648
  %v132 = vsel %vm130, %v131, %v129
  %v133 = vsub.f32 0.0, %v132
  %v134 = vld [vmem:[%s3] sm:$0x1]
  %v136 = vlaneseq
  %v137 = vshrl.u32 %v136, 7
  %v138 = vsub.s32 0, %v137
  %v139 = vrot.slane %v134, %v138
  %v141 = vadd.f32 %v133, %v139
  %142 = vmax.xlane.f32.xlu0 %v141
  %v143 = vpop.xlane.xlu0 %142
  %v144 = vsub.f32 %v141, %v143
  %v145 = vmul.f32 %v144, 1.442695
  %v146 = vpow.pop %v145
  %147 = vadd.xlane.f32.xlu0 %v146
  %v148 = vpop.xlane.xlu0 %147
  %v149 = vlaneseq
  %v150 = vand.u32 %v149, 127
  %v151 = vld [vmem:[%s5] sm:$0xff]
  %152 = vset.pattern.permute.xlu0 0
  %153 = vperm.xlu0 %152, %v151
  %v154 = vpop.permute.xlu0 %153
  %vm155 = vcmp.eq.s32.totalorder %v154, %v150
  %v156 = vsel %vm155, %v146, 0.0
  %157 = vadd.xlane.f32.xlu0 %v156
  %v158 = vpop.xlane.xlu0 %157
  %v159 = vrcp.pop %v148
  %v160 = vmul.f32 %v158, %v159
  %v161 = vsub.f32 1.0, %v160
  %v162 = vmax.f32 %v161, 1e-30
  %v163 = vlog2.pop %v160
  %v164 = vmul.f32 %v163, 0.6931472
  %v165 = vsub.f32 0.0, %v164
  %v166 = vrcp.pop %v162
  %v167 = vmul.f32 %v165, %v166
  %vm168 = vcmask 7168
  %v169 = vsel %vm168, %v167, 0.0
  %170 = vadd.xlane.f32.xlu0 %v169
  %v171 = vpop.xlane.xlu0 %170
  %v172 = vrot.slane %v171, 4
  %v173 = vadd.f32 %v171, %v172
  %v174 = vrot.slane %v173, 2
  %v175 = vadd.f32 %v173, %v174
  %v176 = vrot.slane %v175, 1
  %v177 = vadd.f32 %v175, %v176
  %s178 = vtos %v177
  %v179 = vstv %s178
  %180 = vst [vmem:[%s6] sm:$0xff] %v179
  // Predicated region
  $region26: #{_proxy_nca_loss_impl.1} parent=0 // pred_check
    _
  $region27: #{_proxy_nca_loss_impl.1} parent=0 // pred_check_branch
    %182 = sbr.rel (0) target = $region29
  $region28: #{_proxy_nca_loss_impl.1} parent=0 // pred_region
    _
  $region29: #{_proxy_nca_loss_impl.1} parent=0 // pred_fallthru
    _
  // Predicated region
  $region30: #{_proxy_nca_loss_impl.1} parent=0 // pred_check
    _
  $region31: #{_proxy_nca_loss_impl.1} parent=0 // pred_check_branch
    %184 = sbr.rel (0) target = $region33
  $region32: #{_proxy_nca_loss_impl.1} parent=0 // pred_region
    _
  $region33: #{_proxy_nca_loss_impl.1} parent=0 // pred_fallthru
    _

// kernel: _proxy_nca_loss_impl.1
$region0: #{_proxy_nca_loss_impl.1}
  #allocation0 [shape = 'u32[]', space=smem, size = 0x4, offset = 0x4, fixed_abs, tag = 'smem constant byte address 0x4 - core index']
  #allocation1 [shape = 'u32[144,128]{1,0:T(1,128)}', space=vmem, size = 0x12000, scoped, tag = 'internal scratch']
  %s0 = inlined_call_operand.vmem [shape: f32[8,128], index: 0, kind: input, shape index: {}]
  %s1 = inlined_call_operand.vmem [shape: f32[128,128], index: 1, kind: input, shape index: {}]
  %s2 = inlined_call_operand.vmem [shape: f32[1,128], index: 2, kind: input, shape index: {}]
  %s3 = inlined_call_operand.vmem [shape: f32[1,128], index: 3, kind: input, shape index: {}]
  %s4 = inlined_call_operand.vmem [shape: f32[8,1], index: 4, kind: input, shape index: {}]
  %s5 = inlined_call_operand.vmem [shape: s32[8,1], index: 5, kind: input, shape index: {}]
  %s6 = inlined_call_operand.vmem [shape: f32[8,128], index: 6, kind: output, shape index: {}]
  %s7 = sld [smem:[#allocation0]]
  $region34: #{_proxy_nca_loss_impl.1} parent=0
    _
  %s9 = ssub.s32 1, %s7
  %s10 = scalar_select 0, %s9, %s7
  // Predicated region
  $region2: #{_proxy_nca_loss_impl.1} parent=0 // pred_check
    _
  $region3: #{_proxy_nca_loss_impl.1} parent=0 // pred_check_branch
    %12 = sbr.rel (0) target = $region5
  $region4: #{_proxy_nca_loss_impl.1} parent=0 // pred_region
    _
  $region5: #{_proxy_nca_loss_impl.1} parent=0 // pred_fallthru
    _
  // Predicated region
  $region6: #{_proxy_nca_loss_impl.1} parent=0 // pred_check
    _
  $region7: #{_proxy_nca_loss_impl.1} parent=0 // pred_check_branch
    %14 = sbr.rel (0) target = $region9
  $region8: #{_proxy_nca_loss_impl.1} parent=0 // pred_region
    _
  $region9: #{_proxy_nca_loss_impl.1} parent=0 // pred_fallthru
    _
  // Predicated region
  $region10: #{_proxy_nca_loss_impl.1} parent=0 // pred_check
    _
  $region11: #{_proxy_nca_loss_impl.1} parent=0 // pred_check_branch
    %16 = sbr.rel (0) target = $region13
  $region12: #{_proxy_nca_loss_impl.1} parent=0 // pred_region
    _
  $region13: #{_proxy_nca_loss_impl.1} parent=0 // pred_fallthru
    _
  // Predicated region
  $region14: #{_proxy_nca_loss_impl.1} parent=0 // pred_check
    _
  $region15: #{_proxy_nca_loss_impl.1} parent=0 // pred_check_branch
    %18 = sbr.rel (0) target = $region17
  $region16: #{_proxy_nca_loss_impl.1} parent=0 // pred_region
    _
  $region17: #{_proxy_nca_loss_impl.1} parent=0 // pred_fallthru
    _
  // Predicated region
  $region18: #{_proxy_nca_loss_impl.1} parent=0 // pred_check
    _
  $region19: #{_proxy_nca_loss_impl.1} parent=0 // pred_check_branch
    %20 = sbr.rel (0) target = $region21
  $region20: #{_proxy_nca_loss_impl.1} parent=0 // pred_region
    _
  $region21: #{_proxy_nca_loss_impl.1} parent=0 // pred_fallthru
    _
  // Predicated region
  $region22: #{_proxy_nca_loss_impl.1} parent=0 // pred_check
    _
  $region23: #{_proxy_nca_loss_impl.1} parent=0 // pred_check_branch
    %22 = sbr.rel (0) target = $region25
  $region24: #{_proxy_nca_loss_impl.1} parent=0 // pred_region
    _
  $region25: #{_proxy_nca_loss_impl.1} parent=0 // pred_fallthru
    _
  %v23 = vld [vmem:[%s0] sm:$0xff]
  %v24 = vld [vmem:[%s1] sm:$0xff]
  %v25 = vld [vmem:[%s1 + $0x8] sm:$0xff]
  %v26 = vld [vmem:[%s1 + $0x10] sm:$0xff]
  %v27 = vld [vmem:[%s1 + $0x18] sm:$0xff]
  %v28 = vld [vmem:[%s1 + $0x20] sm:$0xff]
  %v29 = vld [vmem:[%s1 + $0x28] sm:$0xff]
  %v30 = vld [vmem:[%s1 + $0x30] sm:$0xff]
  %v31 = vld [vmem:[%s1 + $0x38] sm:$0xff]
  %v32 = vld [vmem:[%s1 + $0x40] sm:$0xff]
  %v33 = vld [vmem:[%s1 + $0x48] sm:$0xff]
  %v34 = vld [vmem:[%s1 + $0x50] sm:$0xff]
  %v35 = vld [vmem:[%s1 + $0x58] sm:$0xff]
  %v36 = vld [vmem:[%s1 + $0x60] sm:$0xff]
  %v37 = vld [vmem:[%s1 + $0x68] sm:$0xff]
  %v38 = vld [vmem:[%s1 + $0x70] sm:$0xff]
  %v39 = vld [vmem:[%s1 + $0x78] sm:$0xff]
  %40 = vmatprep.subr.mxu0 0.0
  %41 = vmatpush1.msra.mxu0 %v24
  %42 = vmatprep.subr.mxu0 0.0
  %43 = vmatpush1.msra.mxu0 %v25
  %44 = vmatprep.subr.mxu0 0.0
  %45 = vmatpush1.msra.mxu0 %v26
  %46 = vmatprep.subr.mxu0 0.0
  %47 = vmatpush1.msra.mxu0 %v27
  %48 = vmatprep.subr.mxu0 0.0
  %49 = vmatpush1.msra.mxu0 %v28
  %50 = vmatprep.subr.mxu0 0.0
  %51 = vmatpush1.msra.mxu0 %v29
  %52 = vmatprep.subr.mxu0 0.0
  %53 = vmatpush1.msra.mxu0 %v30
  %54 = vmatprep.subr.mxu0 0.0
  %55 = vmatpush1.msra.mxu0 %v31
  %56 = vmatprep.subr.mxu0 0.0
  %57 = vmatpush1.msra.mxu0 %v32
  %58 = vmatprep.subr.mxu0 0.0
  %59 = vmatpush1.msra.mxu0 %v33
  %60 = vmatprep.subr.mxu0 0.0
  %61 = vmatpush1.msra.mxu0 %v34
  %62 = vmatprep.subr.mxu0 0.0
  %63 = vmatpush1.msra.mxu0 %v35
  %64 = vmatprep.subr.mxu0 0.0
  %65 = vmatpush1.msra.mxu0 %v36
  %66 = vmatprep.subr.mxu0 0.0
  %67 = vmatpush1.msra.mxu0 %v37
  %68 = vmatprep.subr.mxu0 0.0
  %69 = vmatpush1.msra.mxu0 %v38
  %70 = vmatprep.subr.mxu0 0.0
  %71 = vmatpush1.msra.mxu0 %v39
  %72 = vmatprep.subr.mxu0 0.0
  %73 = vmatpush1.msra.mxu0 0.0
  %74 = vmatprep.subr.mxu0 0.0
  %75 = vmatpush1.msra.mxu0 0.0
  %76 = vmatprep.subr.mxu0 0.0
  %77 = vmatpush1.msra.mxu0 0.0
  %78 = vmatprep.subr.mxu0 0.0
  %79 = vmatpush1.msra.mxu0 0.0
  %80 = vmatprep.subr.mxu0 0.0
  %81 = vmatpush1.msra.mxu0 0.0
  %82 = vmatprep.subr.mxu0 0.0
  %83 = vmatpush1.msra.mxu0 0.0
  %84 = vmatprep.subr.mxu0 0.0
  %85 = vmatpush1.msra.mxu0 0.0
  %86 = vmatprep.subr.mxu0 0.0
  %87 = vmatpush1.msra.mxu0 0.0
  %88 = vmatprep.subr.mxu0 0.0
  %89 = vmatpush1.msra.mxu0 0.0
  %90 = vmatprep.subr.mxu0 0.0
  %91 = vmatpush1.msra.mxu0 0.0
  %92 = vmatprep.subr.mxu0 0.0
  %93 = vmatpush1.msra.mxu0 0.0
  %94 = vmatprep.subr.mxu0 0.0
  %95 = vmatpush1.msra.mxu0 0.0
  %96 = vmatprep.subr.mxu0 0.0
  %97 = vmatpush1.msra.mxu0 0.0
  %98 = vmatprep.subr.mxu0 0.0
  %99 = vmatpush1.msra.mxu0 0.0
  %100 = vmatprep.subr.mxu0 0.0
  %101 = vmatpush1.msra.mxu0 0.0
  %102 = vmatprep.subr.mxu0 0.0
  %103 = vmatpush1.msra.mxu0 0.0
  %104 = vmatprep.mubr.f32.mxu0 0.0
  %105 = vmatmul.mubr.f32.gmra.mrb[0].mxu0 %v23
  %v106 = vpop.f32.mrb[0].mxu0
  %v107 = vadd.f32 0.0, %v106
  %v108 = vpop.f32.mrb[0].mxu0
  %109 = vdwg.mxu0
  %v110 = vld [vmem:[%s4] sm:$0xff]
  %v111 = vld [vmem:[%s2] sm:$0x1]
  %v113 = vlaneseq
  %v114 = vshrl.u32 %v113, 7
  %v115 = vsub.s32 0, %v114
  %v116 = vrot.slane %v111, %v115
  %v118 = vmul.f32 %v107, %v116
  %120 = vset.pattern.permute.xlu0 0
  %121 = vperm.xlu0 %120, %v110
  %v122 = vpop.permute.xlu0 %121
  %v124 = vadd.f32 %v122, %v118
  %v125 = vmax.f32 %v124, 0.0
  %v126 = vrsqrt.pop %v125
  %v127 = vmul.f32 %v125, %v126
  %vm128 = vcmp.eq.f32.partialorder %v125, inf
  %v129 = vsel %vm128, %v125, %v127
  %vm130 = vcmp.eq.f32.partialorder %v125, 0.0
  %v131 = vand.u32 %v125, 2147483648
  %v132 = vsel %vm130, %v131, %v129
  %v133 = vsub.f32 0.0, %v132
  %v134 = vld [vmem:[%s3] sm:$0x1]
  %v136 = vlaneseq
  %v137 = vshrl.u32 %v136, 7
  %v138 = vsub.s32 0, %v137
  %v139 = vrot.slane %v134, %v138
  %v141 = vadd.f32 %v133, %v139
  %142 = vmax.xlane.f32.xlu0 %v141
  %v143 = vpop.xlane.xlu0 %142
  %v144 = vsub.f32 %v141, %v143
  %v145 = vmul.f32 %v144, 1.442695
  %v146 = vpow.pop %v145
  %147 = vadd.xlane.f32.xlu0 %v146
  %v148 = vpop.xlane.xlu0 %147
  %v149 = vlaneseq
  %v150 = vand.u32 %v149, 127
  %v151 = vld [vmem:[%s5] sm:$0xff]
  %152 = vset.pattern.permute.xlu0 0
  %153 = vperm.xlu0 %152, %v151
  %v154 = vpop.permute.xlu0 %153
  %vm155 = vcmp.eq.s32.totalorder %v154, %v150
  %v156 = vsel %vm155, %v146, 0.0
  %157 = vadd.xlane.f32.xlu0 %v156
  %v158 = vpop.xlane.xlu0 %157
  %v159 = vrcp.pop %v148
  %v160 = vmul.f32 %v158, %v159
  %v161 = vsub.f32 1.0, %v160
  %v162 = vmax.f32 %v161, 1e-30
  %v163 = vlog2.pop %v160
  %v164 = vmul.f32 %v163, 0.6931472
  %v165 = vsub.f32 0.0, %v164
  %v166 = vrcp.pop %v162
  %v167 = vmul.f32 %v165, %v166
  %vm168 = vcmask 7168
  %v169 = vsel %vm168, %v167, 0.0
  %170 = vadd.xlane.f32.xlu0 %v169
  %v171 = vpop.xlane.xlu0 %170
  %v172 = vrot.slane %v171, 4
  %v173 = vadd.f32 %v171, %v172
  %v174 = vrot.slane %v173, 2
  %v175 = vadd.f32 %v173, %v174
  %v176 = vrot.slane %v175, 1
  %v177 = vadd.f32 %v175, %v176
  %s178 = vtos %v177
  %v179 = vstv %s178
  %180 = vst [vmem:[%s6] sm:$0xff] %v179
  // Predicated region
  $region26: #{_proxy_nca_loss_impl.1} parent=0 // pred_check
    _
  $region27: #{_proxy_nca_loss_impl.1} parent=0 // pred_check_branch
    %182 = sbr.rel (0) target = $region29
  $region28: #{_proxy_nca_loss_impl.1} parent=0 // pred_region
    _
  $region29: #{_proxy_nca_loss_impl.1} parent=0 // pred_fallthru
    _
  // Predicated region
  $region30: #{_proxy_nca_loss_impl.1} parent=0 // pred_check
    _
  $region31: #{_proxy_nca_loss_impl.1} parent=0 // pred_check_branch
    %184 = sbr.rel (0) target = $region33
  $region32: #{_proxy_nca_loss_impl.1} parent=0 // pred_region
    _
  $region33: #{_proxy_nca_loss_impl.1} parent=0 // pred_fallthru
    _

</llo_original>
